<compile_context>
chip_gen: v7x
topology: tpu7x:2x2x1
jax: 0.10.0
libtpu: 0.0.40
codegen_flags: <defaults>
</compile_context>

<pallas_src>
import jax
import jax.numpy as jnp
from jax.experimental import pallas as pl
from jax.experimental.pallas import tpu as pltpu


def bahdanau_kernel(enc_ref, dec_ref, w1t_ref, b1_ref, w2t_ref, v_ref, out_ref):
    """One grid step == one batch tile (TB batch elements).

    enc_ref : [TB, S, He]  encoder hidden states (f32, or bf16 if enabled)
    dec_ref : [TB, Hd]     decoder prior hidden state
    w1t_ref : [He, EP]     W1.weight^T, energy dim zero-padded to EP lanes
    b1_ref  : [1, EP]      W1.bias, zero-padded (f32)
    w2t_ref : [Hd, EP]     W2.weight^T (no bias), zero-padded
    v_ref   : [1, EP]      v.weight as a lane-dense row, zero-padded (f32)
    out_ref : [TB, OP]     packed output: ctx in lanes [0,He), attn in [He,He+S)
    """
    TB, S, He = enc_ref.shape
    EP = w1t_ref.shape[-1]
    OP = out_ref.shape[-1]

    enc = enc_ref[...]                                   # [TB, S, He]
    dec = dec_ref[...]                                   # [TB, Hd]

    # W1 projection over all (batch, seq) rows at once: [TB*S, He] @ [He, EP].
    e1 = jnp.dot(enc.reshape(TB * S, He), w1t_ref[...],
                 preferred_element_type=jnp.float32).reshape(TB, S, EP)
    # Decoder projection once per batch row, with W1's bias folded in
    # (saves a full [TB, S, EP] VPU add per step).
    e2 = jnp.dot(dec, w2t_ref[...],
                 preferred_element_type=jnp.float32) + b1_ref[...]

    # energy = tanh(W1(enc) + b1 + W2(dec))              -> [TB, S, EP] f32
    energy = jnp.tanh(e1 + e2[:, None, :])

    # scores = <energy, v> as a VPU multiply + lane reduce (no N=1 MXU matmul).
    # Padded lanes of energy hit v == 0, so they never change the scores.
    scores = jnp.sum(energy * v_ref[...], axis=-1)       # [TB, S]

    # Numerically stable softmax over the sequence (lane) axis.
    m = jnp.max(scores, axis=-1, keepdims=True)
    p = jnp.exp(scores - m)
    attn = p / jnp.sum(p, axis=-1, keepdims=True)        # [TB, S] f32

    # context[b] = sum_s attn[b, s] * enc[b, s, :] as a batched MXU matmul:
    # attn keeps S in lanes (lhs contraction), enc keeps S in sublanes (rhs),
    # so the contraction needs no XLU relayout.
    ctx = jnp.einsum("bqs,bsh->bqh",
                     attn[:, None, :].astype(enc.dtype), enc,
                     preferred_element_type=jnp.float32)[:, 0, :]   # [TB, He]

    # Single lane-dense packed store: [ ctx | attn | zero tail ].
    parts = [ctx.astype(jnp.float32), attn]
    tail = OP - He - S
    if tail > 0:
        parts.append(jnp.zeros((TB, tail), jnp.float32))
    out_ref[...] = jnp.concatenate(parts, axis=-1)


def bahdanau_attention(enc, dec, w1, b1, w2, v, *, use_bf16_matmul=False):
    """enc: [B,S,He], dec: [B,Hd].
    w1: [E,He], b1: [E], w2: [E,Hd], v: [1,E]  (PyTorch nn.Linear layout).
    Returns (context [B,He], attn_weights [B,S])."""
    B, S, He = enc.shape
    Hd = dec.shape[1]
    E = w1.shape[0]
    f32 = jnp.float32

    # Pad the energy dimension up to a multiple of 128 lanes.  b1 and v are
    # padded with exact zeros, so padded energy lanes are tanh(0) = 0 and are
    # multiplied by v == 0 -> the math is unchanged.  Keep that invariant.
    EP = max(128, pl.cdiv(E, 128) * 128)
    epad = EP - E
    w1t = jnp.pad(w1.T.astype(f32), ((0, 0), (0, epad)))            # [He, EP]
    w2t = jnp.pad(w2.T.astype(f32), ((0, 0), (0, epad)))            # [Hd, EP]
    b1r = jnp.pad(b1.astype(f32).reshape(1, E), ((0, 0), (0, epad)))
    vr = jnp.pad(v.astype(f32).reshape(1, E), ((0, 0), (0, epad)))

    # Optional bf16 matmul inputs (kernel keeps f32 accumulation and an f32
    # tanh/softmax/context path).  Off by default to hold 1e-4 vs. the f32 ref.
    mm_dtype = jnp.bfloat16 if use_bf16_matmul else f32
    enc_in = enc.astype(mm_dtype)
    dec_in = dec.astype(mm_dtype)
    w1t_in = w1t.astype(mm_dtype)
    w2t_in = w2t.astype(mm_dtype)

    # One batch tile per grid step; at B=2 the whole batch fits in one step.
    # At scale: pick TB so TB*S >= 256 matmul rows, use TB = B // 2 on v7x so
    # the "parallel" axis spans its two TensorCores, size the enc tile for
    # 64 MiB VMEM (raise vmem_limit_bytes), and single-buffer the constant
    # weight blocks with pipeline_mode=pl.Buffered(1).
    TB = B
    assert B % TB == 0, "batch tile TB must divide batch B"
    grid = (B // TB,)

    # Packed lane-dense output slab: ctx in lanes [0,He), attn in [He,He+S).
    OP = max(128, pl.cdiv(He + S, 128) * 128)
    assert He + S <= OP

    packed = pl.pallas_call(
        bahdanau_kernel,
        grid=grid,
        in_specs=[
            pl.BlockSpec((TB, S, He), lambda b: (b, 0, 0)),   # enc
            pl.BlockSpec((TB, Hd), lambda b: (b, 0)),         # dec
            pl.BlockSpec((He, EP), lambda b: (0, 0)),         # W1^T (padded)
            pl.BlockSpec((1, EP), lambda b: (0, 0)),          # b1   (padded)
            pl.BlockSpec((Hd, EP), lambda b: (0, 0)),         # W2^T (padded)
            pl.BlockSpec((1, EP), lambda b: (0, 0)),          # v row (padded)
        ],
        out_specs=pl.BlockSpec((TB, OP), lambda b: (b, 0)),   # packed ctx|attn
        out_shape=jax.ShapeDtypeStruct((B, OP), f32),
        compiler_params=pltpu.CompilerParams(
            dimension_semantics=("parallel",)),
    )(enc_in, dec_in, w1t_in, b1r, w2t_in, vr)

    ctx = packed[:, :He]
    attn = packed[:, He:He + S]
    return ctx, attn


def reference(enc, dec, w1, b1, w2, v):
    e = jnp.tanh(enc @ w1.T + b1 + (dec[:, None, :] @ w2.T))
    scores = (e @ v.T)[..., 0]
    attn = jax.nn.softmax(scores, axis=1)
    ctx = jnp.einsum("bs,bsh->bh", attn, enc)
    return ctx, attn


if __name__ == "__main__":
    # Small shapes consistent with the module: batch=2, seq=8,
    # encoder_hidden=32, decoder_hidden=32, energy_size=15 (from the script).
    B, S, He, Hd, E = 2, 8, 32, 32, 15

    key = jax.random.PRNGKey(0)
    k_enc, k_dec, k_w1, k_b1, k_w2, k_v = jax.random.split(key, 6)

    enc = jax.random.normal(k_enc, (B, S, He), dtype=jnp.float32)
    dec = jax.random.normal(k_dec, (B, Hd), dtype=jnp.float32)

    # Deterministic parameters matching nn.Linear layouts.
    w1 = 0.1 * jax.random.normal(k_w1, (E, He), dtype=jnp.float32)
    b1 = 0.1 * jax.random.normal(k_b1, (E,), dtype=jnp.float32)
    w2 = 0.1 * jax.random.normal(k_w2, (E, Hd), dtype=jnp.float32)
    v = 0.1 * jax.random.normal(k_v, (1, E), dtype=jnp.float32)

    ctx, attn = bahdanau_attention(enc, dec, w1, b1, w2, v)
    jax.block_until_ready((ctx, attn))

    ctx_ref, attn_ref = reference(enc, dec, w1, b1, w2, v)
    assert jnp.allclose(ctx, ctx_ref, atol=1e-4, rtol=1e-4)
    assert jnp.allclose(attn, attn_ref, atol=1e-4, rtol=1e-4)
    assert attn.shape == (B, S) and ctx.shape == (B, He)

    print("KERNEL_OK")
</pallas_src>

<mosaic_0001>
module attributes {stable_mosaic.version = 11 : i64} {
  func.func @bahdanau_kernel(%arg0: i32, %arg1: memref<2x8x32xf32, #tpu.memory_space<vmem>>, %arg2: memref<2x32xf32, #tpu.memory_space<vmem>>, %arg3: memref<32x128xf32, #tpu.memory_space<vmem>>, %arg4: memref<1x128xf32, #tpu.memory_space<vmem>>, %arg5: memref<32x128xf32, #tpu.memory_space<vmem>>, %arg6: memref<1x128xf32, #tpu.memory_space<vmem>>, %arg7: memref<2x128xf32, #tpu.memory_space<vmem>>) attributes {dimension_semantics = [#tpu.dimension_semantics<parallel>], iteration_bounds = array<i64: 1>, scalar_prefetch = 0 : i64, scratch_operands = 0 : i64, tpu.core_type = #tpu.core_type<tc>, window_params = [{transform_indices = @transform_0, window_bounds = array<i64: 2, 8, 32>}, {transform_indices = @transform_1, window_bounds = array<i64: 2, 32>}, {pipeline_mode = #tpu.pipeline_mode<synchronous>, transform_indices = @transform_2, window_bounds = array<i64: 32, 128>}, {pipeline_mode = #tpu.pipeline_mode<synchronous>, transform_indices = @transform_3, window_bounds = array<i64: 1, 128>}, {pipeline_mode = #tpu.pipeline_mode<synchronous>, transform_indices = @transform_4, window_bounds = array<i64: 32, 128>}, {pipeline_mode = #tpu.pipeline_mode<synchronous>, transform_indices = @transform_5, window_bounds = array<i64: 1, 128>}, {transform_indices = @transform_6, window_bounds = array<i64: 2, 128>}]} {
    %c0 = arith.constant 0 : index
    %c0_0 = arith.constant 0 : index
    %c0_1 = arith.constant 0 : index
    %0 = vector.load %arg1[%c0, %c0_0, %c0_1] : memref<2x8x32xf32, #tpu.memory_space<vmem>>, vector<2x8x32xf32>
    %c0_2 = arith.constant 0 : index
    %c0_3 = arith.constant 0 : index
    %1 = vector.load %arg2[%c0_2, %c0_3] : memref<2x32xf32, #tpu.memory_space<vmem>>, vector<2x32xf32>
    %2 = vector.shape_cast %0 : vector<2x8x32xf32> to vector<16x32xf32>
    %c0_4 = arith.constant 0 : index
    %c0_5 = arith.constant 0 : index
    %3 = vector.load %arg3[%c0_4, %c0_5] : memref<32x128xf32, #tpu.memory_space<vmem>>, vector<32x128xf32>
    %cst = arith.constant dense<0.000000e+00> : vector<16x128xf32>
    %4 = tpu.matmul %2, %3, %cst {dimension_numbers = #tpu.dot_dimension_numbers<[1], [0], [0], [1], [0, 0, 1, 1], [], []>} : vector<16x32xf32>, vector<32x128xf32>, vector<16x128xf32> -> vector<16x128xf32>
    %5 = vector.shape_cast %4 : vector<16x128xf32> to vector<2x8x128xf32>
    %c0_6 = arith.constant 0 : index
    %c0_7 = arith.constant 0 : index
    %6 = vector.load %arg5[%c0_6, %c0_7] : memref<32x128xf32, #tpu.memory_space<vmem>>, vector<32x128xf32>
    %cst_8 = arith.constant dense<0.000000e+00> : vector<2x128xf32>
    %7 = tpu.matmul %1, %6, %cst_8 {dimension_numbers = #tpu.dot_dimension_numbers<[1], [0], [0], [1], [0, 0, 1, 1], [], []>} : vector<2x32xf32>, vector<32x128xf32>, vector<2x128xf32> -> vector<2x128xf32>
    %c0_9 = arith.constant 0 : index
    %c0_10 = arith.constant 0 : index
    %8 = vector.load %arg4[%c0_9, %c0_10] : memref<1x128xf32, #tpu.memory_space<vmem>>, vector<1x128xf32>
    %9 = vector.broadcast %8 : vector<1x128xf32> to vector<2x128xf32>
    %10 = arith.addf %7, %9 : vector<2x128xf32>
    %11 = vector.shape_cast %10 : vector<2x128xf32> to vector<2x1x128xf32>
    %12 = vector.broadcast %11 : vector<2x1x128xf32> to vector<2x8x128xf32>
    %13 = arith.addf %5, %12 : vector<2x8x128xf32>
    %14 = math.tanh %13 : vector<2x8x128xf32>
    %c0_11 = arith.constant 0 : index
    %c0_12 = arith.constant 0 : index
    %15 = vector.load %arg6[%c0_11, %c0_12] : memref<1x128xf32, #tpu.memory_space<vmem>>, vector<1x128xf32>
    %16 = vector.shape_cast %15 : vector<1x128xf32> to vector<1x1x128xf32>
    %17 = vector.broadcast %16 : vector<1x1x128xf32> to vector<2x8x128xf32>
    %18 = arith.mulf %14, %17 : vector<2x8x128xf32>
    %cst_13 = arith.constant dense<0.000000e+00> : vector<2x8xf32>
    %19 = vector.multi_reduction <add>, %18, %cst_13 [2] : vector<2x8x128xf32> to vector<2x8xf32>
    %cst_14 = arith.constant dense<0xFF800000> : vector<2xf32>
    %20 = vector.multi_reduction <maximumf>, %19, %cst_14 [1] : vector<2x8xf32> to vector<2xf32>
    %21 = vector.shape_cast %20 : vector<2xf32> to vector<2x1xf32>
    %22 = vector.broadcast %21 : vector<2x1xf32> to vector<2x8xf32>
    %23 = arith.subf %19, %22 : vector<2x8xf32>
    %24 = math.exp %23 : vector<2x8xf32>
    %cst_15 = arith.constant dense<0.000000e+00> : vector<2xf32>
    %25 = vector.multi_reduction <add>, %24, %cst_15 [1] : vector<2x8xf32> to vector<2xf32>
    %26 = vector.shape_cast %25 : vector<2xf32> to vector<2x1xf32>
    %27 = vector.broadcast %26 : vector<2x1xf32> to vector<2x8xf32>
    %28 = arith.divf %24, %27 : vector<2x8xf32>
    %29 = vector.shape_cast %28 : vector<2x8xf32> to vector<2x1x8xf32>
    "tpu.trace_start"() <{level = 10 : i32, message = "bqs,bsh->bqh"}> : () -> ()
    %cst_16 = arith.constant dense<0.000000e+00> : vector<2x1x32xf32>
    %30 = tpu.matmul %29, %0, %cst_16 {dimension_numbers = #tpu.dot_dimension_numbers<[2], [1], [1], [2], [0, 0, 0, 1, 1, 2], [0], [0]>} : vector<2x1x8xf32>, vector<2x8x32xf32>, vector<2x1x32xf32> -> vector<2x1x32xf32>
    "tpu.trace_stop"() : () -> ()
    %31 = vector.shape_cast %30 : vector<2x1x32xf32> to vector<2x32xf32>
    %cst_17 = arith.constant 0.000000e+00 : f32
    %32 = vector.broadcast %cst_17 : f32 to vector<2x88xf32>
    %33 = tpu.concatenate %31, %28, %32 in 1 : vector<2x32xf32>, vector<2x8xf32>, vector<2x88xf32> -> vector<2x128xf32>
    %c0_18 = arith.constant 0 : index
    %c0_19 = arith.constant 0 : index
    %34 = vector.load %arg7[%c0_18, %c0_19] : memref<2x128xf32, #tpu.memory_space<vmem>>, vector<2x128xf32>
    tpu.vector_store %arg7[%c0_18, %c0_19], %33 {strides = array<i32>} : memref<2x128xf32, #tpu.memory_space<vmem>>, vector<2x128xf32>,
    return
  }
  func.func @transform_0(%arg0: i32) -> (i32, i32, i32) {
    %c0_i32 = arith.constant 0 : i32
    %c0_i32_0 = arith.constant 0 : i32
    %c0_i32_1 = arith.constant 0 : i32
    return %arg0, %c0_i32, %c0_i32_0 : i32, i32, i32
  }
  func.func @transform_1(%arg0: i32) -> (i32, i32) {
    %c0_i32 = arith.constant 0 : i32
    %c0_i32_0 = arith.constant 0 : i32
    return %arg0, %c0_i32 : i32, i32
  }
  func.func @transform_2(%arg0: i32) -> (i32, i32) {
    %c0_i32 = arith.constant 0 : i32
    %c0_i32_0 = arith.constant 0 : i32
    %c0_i32_1 = arith.constant 0 : i32
    return %c0_i32, %c0_i32_0 : i32, i32
  }
  func.func @transform_3(%arg0: i32) -> (i32, i32) {
    %c0_i32 = arith.constant 0 : i32
    %c0_i32_0 = arith.constant 0 : i32
    %c0_i32_1 = arith.constant 0 : i32
    return %c0_i32, %c0_i32_0 : i32, i32
  }
  func.func @transform_4(%arg0: i32) -> (i32, i32) {
    %c0_i32 = arith.constant 0 : i32
    %c0_i32_0 = arith.constant 0 : i32
    %c0_i32_1 = arith.constant 0 : i32
    return %c0_i32, %c0_i32_0 : i32, i32
  }
  func.func @transform_5(%arg0: i32) -> (i32, i32) {
    %c0_i32 = arith.constant 0 : i32
    %c0_i32_0 = arith.constant 0 : i32
    %c0_i32_1 = arith.constant 0 : i32
    return %c0_i32, %c0_i32_0 : i32, i32
  }
  func.func @transform_6(%arg0: i32) -> (i32, i32) {
    %c0_i32 = arith.constant 0 : i32
    %c0_i32_0 = arith.constant 0 : i32
    return %arg0, %c0_i32 : i32, i32
  }
}

</mosaic_0001>

<llo_original>
// kernel: tpu_custom_call.1
$region0: #{tpu_custom_call.1}
  #allocation0 [shape = 'u32[]', space=smem, size = 0x4, offset = 0x4, fixed_abs, tag = 'smem constant byte address 0x4 - core index']
  #allocation1 [shape = 'u32[144,128]{1,0:T(1,128)}', space=vmem, size = 0x12000, scoped, tag = 'internal scratch']
  %s0 = inlined_call_operand.hbm [shape: f32[2,8,32], index: 0, kind: input, shape index: {}]
  %s1 = inlined_call_operand.vmem [shape: f32[2,32], index: 1, kind: input, shape index: {}]
  %s2 = inlined_call_operand.hbm [shape: f32[32,128], index: 2, kind: input, shape index: {}]
  %s3 = inlined_call_operand.vmem [shape: f32[1,128], index: 3, kind: input, shape index: {}]
  %s4 = inlined_call_operand.hbm [shape: f32[32,128], index: 4, kind: input, shape index: {}]
  %s5 = inlined_call_operand.vmem [shape: f32[1,128], index: 5, kind: input, shape index: {}]
  %s6 = inlined_call_operand.hbm [shape: f32[2,128], index: 6, kind: output, shape index: {}]
  %s7 = sld [smem:[#allocation0]]
  $region46: #{tpu_custom_call.1} parent=0
    _
  %s9 = ssub.s32 1, %s7
  %s10 = scalar_select 0, %s9, %s7
  $region1: #{tpu_custom_call.1} parent=0
    #allocation2 [shape = 'u8[8192]{0}', space=vmem, size = 0x2000, scoped, tag = 'input window, operand 0, single buffered']
    #allocation3 [shape = 's32[1]{0}', space=sflag, size = 0x4, scoped, tag = 'scoped memory for tpu_custom_call.1']
    #allocation4 [shape = 's32[1]{0}', space=sflag, size = 0x4, scoped, tag = 'scoped memory for tpu_custom_call.1']
    #allocation5 [shape = 'u8[16384]{0}', space=vmem, size = 0x4000, scoped, tag = 'input window, operand 2, single buffered']
    #allocation6 [shape = 's32[1]{0}', space=sflag, size = 0x4, scoped, tag = 'scoped memory for tpu_custom_call.1']
    #allocation7 [shape = 'u8[16384]{0}', space=vmem, size = 0x4000, scoped, tag = 'input window, operand 4, single buffered']
    #allocation8 [shape = 'u8[1024]{0}', space=vmem, size = 0x400, scoped, tag = 'output window, operand 0, single buffered']
    %11 = vsyncpa [#allocation3], 0
    %12 = vsyncpa [#allocation6], 0
    %13 = vsyncpa [#allocation4], 0
    // Predicated region
    $region2: #{tpu_custom_call.1} parent=1 // pred_check
      _
    $region3: #{tpu_custom_call.1} parent=1 // pred_check_branch
      %15 = sbr.rel (0) target = $region5
    $region4: #{tpu_custom_call.1} parent=1 // pred_region
      %s17 = ssub.s32 256, 256
      %18 = vsyncadd [#allocation3], %s17
      %s19 = sshll.u32 [#allocation2], 4
      %s20 = int_to_ptr.vmem [resolvable:$true] %s19
      %25 = dma.hbm_to_vmem [thread:$0]  %s0, 256, %s20, [#allocation3], 128, 128, 8
    $region5: #{tpu_custom_call.1} parent=1 // pred_fallthru
      _
    // Predicated region
    $region6: #{tpu_custom_call.1} parent=1 // pred_check
      _
    $region7: #{tpu_custom_call.1} parent=1 // pred_check_branch
      %27 = sbr.rel (0) target = $region9
    $region8: #{tpu_custom_call.1} parent=1 // pred_region
      _
    $region9: #{tpu_custom_call.1} parent=1 // pred_fallthru
      _
    // Predicated region
    $region10: #{tpu_custom_call.1} parent=1 // pred_check
      _
    $region11: #{tpu_custom_call.1} parent=1 // pred_check_branch
      %29 = sbr.rel (0) target = $region13
    $region12: #{tpu_custom_call.1} parent=1 // pred_region
      %s31 = ssub.s32 512, 512
      %32 = vsyncadd [#allocation6], %s31
      %s33 = sshll.u32 [#allocation5], 4
      %s34 = int_to_ptr.vmem [resolvable:$true] %s33
      %39 = dma.hbm_to_vmem [thread:$0]  %s2, 512, %s34, [#allocation6], 128, 128, 8
    $region13: #{tpu_custom_call.1} parent=1 // pred_fallthru
      _
    // Predicated region
    $region14: #{tpu_custom_call.1} parent=1 // pred_check
      _
    $region15: #{tpu_custom_call.1} parent=1 // pred_check_branch
      %41 = sbr.rel (0) target = $region17
    $region16: #{tpu_custom_call.1} parent=1 // pred_region
      _
    $region17: #{tpu_custom_call.1} parent=1 // pred_fallthru
      _
    // Predicated region
    $region18: #{tpu_custom_call.1} parent=1 // pred_check
      _
    $region19: #{tpu_custom_call.1} parent=1 // pred_check_branch
      %43 = sbr.rel (0) target = $region21
    $region20: #{tpu_custom_call.1} parent=1 // pred_region
      %s45 = ssub.s32 512, 512
      %46 = vsyncadd [#allocation6], %s45
      %s47 = sshll.u32 [#allocation7], 4
      %s48 = int_to_ptr.vmem [resolvable:$true] %s47
      %53 = dma.hbm_to_vmem [thread:$0]  %s4, 512, %s48, [#allocation6], 128, 128, 8
    $region21: #{tpu_custom_call.1} parent=1 // pred_fallthru
      _
    // Predicated region
    $region22: #{tpu_custom_call.1} parent=1 // pred_check
      _
    $region23: #{tpu_custom_call.1} parent=1 // pred_check_branch
      %55 = sbr.rel (0) target = $region25
    $region24: #{tpu_custom_call.1} parent=1 // pred_region
      _
    $region25: #{tpu_custom_call.1} parent=1 // pred_fallthru
      _
    // Predicated region
    $region26: #{tpu_custom_call.1} parent=1 // pred_check
      _
    $region27: #{tpu_custom_call.1} parent=1 // pred_check_branch
      %57 = sbr.rel (0) target = $region29
    $region28: #{tpu_custom_call.1} parent=1 // pred_region
      %58 = dma.done [#allocation3], 256
    $region29: #{tpu_custom_call.1} parent=1 // pred_fallthru
      _
    // Predicated region
    $region30: #{tpu_custom_call.1} parent=1 // pred_check
      _
    $region31: #{tpu_custom_call.1} parent=1 // pred_check_branch
      %60 = sbr.rel (0) target = $region33
    $region32: #{tpu_custom_call.1} parent=1 // pred_region
      %61 = dma.done [#allocation6], 512
    $region33: #{tpu_custom_call.1} parent=1 // pred_fallthru
      _
    // Predicated region
    $region34: #{tpu_custom_call.1} parent=1 // pred_check
      _
    $region35: #{tpu_custom_call.1} parent=1 // pred_check_branch
      %63 = sbr.rel (0) target = $region37
    $region36: #{tpu_custom_call.1} parent=1 // pred_region
      %64 = dma.done [#allocation6], 512
    $region37: #{tpu_custom_call.1} parent=1 // pred_fallthru
      _
    %v65 = vld [vmem:[#allocation2] sm:$0xff]
    %v66 = vld [vmem:[#allocation2 + $0x8] sm:$0xff]
    %v67 = vld [vmem:[%s1] sm:$0x3]
    %v68 = vld [vmem:[#allocation5] sm:$0xff]
    %v69 = vld [vmem:[#allocation5 + $0x8] sm:$0xff]
    %v70 = vld [vmem:[#allocation5 + $0x10] sm:$0xff]
    %v71 = vld [vmem:[#allocation5 + $0x18] sm:$0xff]
    %vm72 = vcmask 261120
    %v74 = vsel %vm72, %v65, 0
    %v77 = vsel %vm72, %v66, 0
    %79 = vmatprep.subr.mxu0 0.0
    %80 = vmatpush1.msra.mxu0 %v68
    %81 = vmatprep.subr.mxu0 0.0
    %82 = vmatpush1.msra.mxu0 %v69
    %83 = vmatprep.subr.mxu0 0.0
    %84 = vmatpush1.msra.mxu0 %v70
    %85 = vmatprep.subr.mxu0 0.0
    %86 = vmatpush1.msra.mxu0 %v71
    %87 = vmatprep.subr.mxu0 0.0
    %88 = vmatpush1.msra.mxu0 0.0
    %89 = vmatprep.subr.mxu0 0.0
    %90 = vmatpush1.msra.mxu0 0.0
    %91 = vmatprep.subr.mxu0 0.0
    %92 = vmatpush1.msra.mxu0 0.0
    %93 = vmatprep.subr.mxu0 0.0
    %94 = vmatpush1.msra.mxu0 0.0
    %95 = vmatprep.subr.mxu0 0.0
    %96 = vmatpush1.msra.mxu0 0.0
    %97 = vmatprep.subr.mxu0 0.0
    %98 = vmatpush1.msra.mxu0 0.0
    %99 = vmatprep.subr.mxu0 0.0
    %100 = vmatpush1.msra.mxu0 0.0
    %101 = vmatprep.subr.mxu0 0.0
    %102 = vmatpush1.msra.mxu0 0.0
    %103 = vmatprep.subr.mxu0 0.0
    %104 = vmatpush1.msra.mxu0 0.0
    %105 = vmatprep.subr.mxu0 0.0
    %106 = vmatpush1.msra.mxu0 0.0
    %107 = vmatprep.subr.mxu0 0.0
    %108 = vmatpush1.msra.mxu0 0.0
    %109 = vmatprep.subr.mxu0 0.0
    %110 = vmatpush1.msra.mxu0 0.0
    %111 = vmatprep.subr.mxu0 0.0
    %112 = vmatpush1.msra.mxu0 0.0
    %113 = vmatprep.subr.mxu0 0.0
    %114 = vmatpush1.msra.mxu0 0.0
    %115 = vmatprep.subr.mxu0 0.0
    %116 = vmatpush1.msra.mxu0 0.0
    %117 = vmatprep.subr.mxu0 0.0
    %118 = vmatpush1.msra.mxu0 0.0
    %119 = vmatprep.subr.mxu0 0.0
    %120 = vmatpush1.msra.mxu0 0.0
    %121 = vmatprep.subr.mxu0 0.0
    %122 = vmatpush1.msra.mxu0 0.0
    %123 = vmatprep.subr.mxu0 0.0
    %124 = vmatpush1.msra.mxu0 0.0
    %125 = vmatprep.subr.mxu0 0.0
    %126 = vmatpush1.msra.mxu0 0.0
    %127 = vmatprep.subr.mxu0 0.0
    %128 = vmatpush1.msra.mxu0 0.0
    %129 = vmatprep.subr.mxu0 0.0
    %130 = vmatpush1.msra.mxu0 0.0
    %131 = vmatprep.subr.mxu0 0.0
    %132 = vmatpush1.msra.mxu0 0.0
    %133 = vmatprep.subr.mxu0 0.0
    %134 = vmatpush1.msra.mxu0 0.0
    %135 = vmatprep.subr.mxu0 0.0
    %136 = vmatpush1.msra.mxu0 0.0
    %137 = vmatprep.subr.mxu0 0.0
    %138 = vmatpush1.msra.mxu0 0.0
    %139 = vmatprep.subr.mxu0 0.0
    %140 = vmatpush1.msra.mxu0 0.0
    %141 = vmatprep.subr.mxu0 0.0
    %142 = vmatpush1.msra.mxu0 0.0
    %143 = vmatprep.mubr.f32.mxu0 0.0
    %144 = vmatmul.mubr.f32.gmra.mrb[0].mxu0 %v74
    %v145 = vpop.f32.mrb[0].mxu0
    %v146 = vadd.f32 0.0, %v145
    %v147 = vpop.f32.mrb[0].mxu0
    %148 = vmatprep.mubr.f32.mxu0 0.0
    %149 = vmatmul.mubr.f32.gmra.mrb[0].mxu0 %v77
    %v150 = vpop.f32.mrb[0].mxu0
    %v151 = vadd.f32 0.0, %v150
    %v152 = vpop.f32.mrb[0].mxu0
    %153 = vdwg.mxu0
    %v154 = vld [vmem:[#allocation7] sm:$0xff]
    %v155 = vld [vmem:[#allocation7 + $0x8] sm:$0xff]
    %v156 = vld [vmem:[#allocation7 + $0x10] sm:$0xff]
    %v157 = vld [vmem:[#allocation7 + $0x18] sm:$0xff]
    %v158 = vld [vmem:[%s3] sm:$0x1]
    %v160 = vlaneseq
    %v161 = vshrl.u32 %v160, 7
    %v162 = vsub.s32 0, %v161
    %v163 = vrot.slane %v158, %v162
    %v166 = vsel %vm72, %v67, 0
    %168 = vmatprep.subr.mxu0 0.0
    %169 = vmatpush1.msra.mxu0 %v154
    %170 = vmatprep.subr.mxu0 0.0
    %171 = vmatpush1.msra.mxu0 %v155
    %172 = vmatprep.subr.mxu0 0.0
    %173 = vmatpush1.msra.mxu0 %v156
    %174 = vmatprep.subr.mxu0 0.0
    %175 = vmatpush1.msra.mxu0 %v157
    %176 = vmatprep.subr.mxu0 0.0
    %177 = vmatpush1.msra.mxu0 0.0
    %178 = vmatprep.subr.mxu0 0.0
    %179 = vmatpush1.msra.mxu0 0.0
    %180 = vmatprep.subr.mxu0 0.0
    %181 = vmatpush1.msra.mxu0 0.0
    %182 = vmatprep.subr.mxu0 0.0
    %183 = vmatpush1.msra.mxu0 0.0
    %184 = vmatprep.subr.mxu0 0.0
    %185 = vmatpush1.msra.mxu0 0.0
    %186 = vmatprep.subr.mxu0 0.0
    %187 = vmatpush1.msra.mxu0 0.0
    %188 = vmatprep.subr.mxu0 0.0
    %189 = vmatpush1.msra.mxu0 0.0
    %190 = vmatprep.subr.mxu0 0.0
    %191 = vmatpush1.msra.mxu0 0.0
    %192 = vmatprep.subr.mxu0 0.0
    %193 = vmatpush1.msra.mxu0 0.0
    %194 = vmatprep.subr.mxu0 0.0
    %195 = vmatpush1.msra.mxu0 0.0
    %196 = vmatprep.subr.mxu0 0.0
    %197 = vmatpush1.msra.mxu0 0.0
    %198 = vmatprep.subr.mxu0 0.0
    %199 = vmatpush1.msra.mxu0 0.0
    %200 = vmatprep.subr.mxu0 0.0
    %201 = vmatpush1.msra.mxu0 0.0
    %202 = vmatprep.subr.mxu0 0.0
    %203 = vmatpush1.msra.mxu0 0.0
    %204 = vmatprep.subr.mxu0 0.0
    %205 = vmatpush1.msra.mxu0 0.0
    %206 = vmatprep.subr.mxu0 0.0
    %207 = vmatpush1.msra.mxu0 0.0
    %208 = vmatprep.subr.mxu0 0.0
    %209 = vmatpush1.msra.mxu0 0.0
    %210 = vmatprep.subr.mxu0 0.0
    %211 = vmatpush1.msra.mxu0 0.0
    %212 = vmatprep.subr.mxu0 0.0
    %213 = vmatpush1.msra.mxu0 0.0
    %214 = vmatprep.subr.mxu0 0.0
    %215 = vmatpush1.msra.mxu0 0.0
    %216 = vmatprep.subr.mxu0 0.0
    %217 = vmatpush1.msra.mxu0 0.0
    %218 = vmatprep.subr.mxu0 0.0
    %219 = vmatpush1.msra.mxu0 0.0
    %220 = vmatprep.subr.mxu0 0.0
    %221 = vmatpush1.msra.mxu0 0.0
    %222 = vmatprep.subr.mxu0 0.0
    %223 = vmatpush1.msra.mxu0 0.0
    %224 = vmatprep.subr.mxu0 0.0
    %225 = vmatpush1.msra.mxu0 0.0
    %226 = vmatprep.subr.mxu0 0.0
    %227 = vmatpush1.msra.mxu0 0.0
    %228 = vmatprep.subr.mxu0 0.0
    %229 = vmatpush1.msra.mxu0 0.0
    %230 = vmatprep.subr.mxu0 0.0
    %231 = vmatpush1.msra.mxu0 0.0
    %232 = vmatprep.mubr.f32.mxu0 0.0
    %233 = vmatmul.mubr.f32.gmra.mrb[0].mxu0 %v166
    %v234 = vpop.f32.mrb[0].mxu0
    %v235 = vadd.f32 %v163, %v234
    %v236 = vpop.f32.mrb[0].mxu0
    %237 = vdwg.mxu0
    %v240 = vunpack.c.l.s4 1966171168
    %v241 = vunpack.c.0.s8 %v240
    %v242 = vlaneseq
    %v243 = vshrl.u32 %v242, 7
    %v244 = vsub.s32 %v241, %v243
    %v245 = vrot.slane %v235, %v244
    %v246 = vcombine.high %v245, %v245
    %v248 = vunpack.c.l.s4 1966171168
    %v249 = vunpack.c.0.s8 %v248
    %v250 = vlaneseq
    %v251 = vshrl.u32 %v250, 7
    %v252 = vsub.s32 %v249, %v251
    %v253 = vrot.slane %v245, %v252
    %v255 = vunpack.c.l.s4 1966171168
    %v256 = vunpack.c.0.s8 %v255
    %v257 = vlaneseq
    %v258 = vshrl.u32 %v257, 7
    %v259 = vsub.s32 %v256, %v258
    %v260 = vrot.slane %v246, %v259
    %v261 = vlaneseq
    %v262 = vshrl.u32 %v261, 7
    %v263 = vsub.s32 0, %v262
    %v264 = vrot.slane %v253, %v263
    %v265 = vlaneseq
    %v266 = vshrl.u32 %v265, 7
    %v267 = vsub.s32 0, %v266
    %v268 = vrot.slane %v260, %v267
    %v271 = vadd.f32 %v146, %v264
    %v272 = vadd.f32 %v151, %v268
    %v273 = vtanh.pop %v271
    %v274 = vtanh.pop %v272
    %v275 = vld [vmem:[%s5] sm:$0x1]
    %v277 = vlaneseq
    %v278 = vshrl.u32 %v277, 7
    %v279 = vsub.s32 0, %v278
    %v280 = vrot.slane %v275, %v279
    %v282 = vmul.f32 %v273, %v280
    %v283 = vmul.f32 %v274, %v280
    %284 = vadd.xlane.f32.xlu0 %v282
    %v285 = vpop.xlane.xlu0 %284
    %286 = vadd.xlane.f32.xlu0 %v283
    %v287 = vpop.xlane.xlu0 %286
    %v290 = vlaneseq
    %v291 = vand.u32 %v290, 127
    %v292 = vlaneseq
    %v293 = vshrl.u32 %v292, 7
    %v294 = vsub.s32 %v291, %v293
    %v295 = vrot.slane %v285, %v294
    %v296 = vlaneseq
    %v297 = vshrl.u32 %v296, 7
    %v298 = vsub.s32 %v291, %v297
    %v299 = vrot.slane %v287, %v298
    %vm300 = vcmask 1041409
    %v301 = vsel %vm300, %v299, %v295
    %vm303 = vcmask 58368
    %v304 = vsel %vm303, %v301, -inf
    %305 = vmax.xlane.f32.xlu0 %v304
    %v306 = vpop.xlane.xlu0 %305
    %v308 = vlaneseq
    %v309 = vshrl.u32 %v308, 7
    %v310 = vsub.s32 0, %v309
    %v311 = vrot.slane %v306, %v310
    %v312 = vlaneseq
    %v313 = vshrl.u32 %v312, 7
    %v314 = vsub.s32 1, %v313
    %v315 = vrot.slane %v306, %v314
    %v318 = vsub.f32 %v285, %v311
    %v319 = vsub.f32 %v287, %v315
    %v320 = vmul.f32 %v318, 1.442695
    %v321 = vpow.pop %v320
    %v322 = vmul.f32 %v319, 1.442695
    %v323 = vpow.pop %v322
    %326 = vset.pattern.permute.xlu0 0
    %327 = vperm.xlu0 %326, %v321
    %v328 = vpop.permute.xlu0 %327
    %329 = vset.pattern.permute.xlu0 0
    %330 = vperm.xlu0 %329, %v323
    %v331 = vpop.permute.xlu0 %330
    %v332 = vlaneseq
    %v333 = vshrl.u32 %v332, 7
    %v334 = vsub.s32 %v291, %v333
    %v335 = vrot.slane %v328, %v334
    %v336 = vlaneseq
    %v337 = vshrl.u32 %v336, 7
    %v338 = vsub.s32 %v291, %v337
    %v339 = vrot.slane %v331, %v338
    %v340 = vsel %vm300, %v339, %v335
    %v342 = vsel %vm303, %v340, 0.0
    %343 = vadd.xlane.f32.xlu0 %v342
    %v344 = vpop.xlane.xlu0 %343
    %v346 = vlaneseq
    %v347 = vshrl.u32 %v346, 7
    %v348 = vsub.s32 0, %v347
    %v349 = vrot.slane %v344, %v348
    %v350 = vlaneseq
    %v351 = vshrl.u32 %v350, 7
    %v352 = vsub.s32 1, %v351
    %v353 = vrot.slane %v344, %v352
    %v356 = vrcp.pop %v349
    %v357 = vmul.f32 %v321, %v356
    %v358 = vrcp.pop %v353
    %v359 = vmul.f32 %v323, %v358
    %361 = vset.pattern.permute.xlu0 0
    %362 = vperm.xlu0 %361, %v357
    %v363 = vpop.permute.xlu0 %362
    %v364 = vlaneseq
    %v365 = vshrl.u32 %v364, 7
    %v366 = vsub.s32 %v291, %v365
    %v367 = vrot.slane %v363, %v366
    %vm368 = vcmask 64512
    %v369 = vsel %vm368, %v367, 0
    %371 = vmatprep.subr.mxu0 0.0
    %372 = vmatpush1.msra.mxu0 %v65
    %373 = vmatprep.subr.mxu0 0.0
    %374 = vmatpush1.msra.mxu0 0.0
    %375 = vmatprep.subr.mxu0 0.0
    %376 = vmatpush1.msra.mxu0 0.0
    %377 = vmatprep.subr.mxu0 0.0
    %378 = vmatpush1.msra.mxu0 0.0
    %379 = vmatprep.subr.mxu0 0.0
    %380 = vmatpush1.msra.mxu0 0.0
    %381 = vmatprep.subr.mxu0 0.0
    %382 = vmatpush1.msra.mxu0 0.0
    %383 = vmatprep.subr.mxu0 0.0
    %384 = vmatpush1.msra.mxu0 0.0
    %385 = vmatprep.subr.mxu0 0.0
    %386 = vmatpush1.msra.mxu0 0.0
    %387 = vmatprep.subr.mxu0 0.0
    %388 = vmatpush1.msra.mxu0 0.0
    %389 = vmatprep.subr.mxu0 0.0
    %390 = vmatpush1.msra.mxu0 0.0
    %391 = vmatprep.subr.mxu0 0.0
    %392 = vmatpush1.msra.mxu0 0.0
    %393 = vmatprep.subr.mxu0 0.0
    %394 = vmatpush1.msra.mxu0 0.0
    %395 = vmatprep.subr.mxu0 0.0
    %396 = vmatpush1.msra.mxu0 0.0
    %397 = vmatprep.subr.mxu0 0.0
    %398 = vmatpush1.msra.mxu0 0.0
    %399 = vmatprep.subr.mxu0 0.0
    %400 = vmatpush1.msra.mxu0 0.0
    %401 = vmatprep.subr.mxu0 0.0
    %402 = vmatpush1.msra.mxu0 0.0
    %403 = vmatprep.subr.mxu0 0.0
    %404 = vmatpush1.msra.mxu0 0.0
    %405 = vmatprep.subr.mxu0 0.0
    %406 = vmatpush1.msra.mxu0 0.0
    %407 = vmatprep.subr.mxu0 0.0
    %408 = vmatpush1.msra.mxu0 0.0
    %409 = vmatprep.subr.mxu0 0.0
    %410 = vmatpush1.msra.mxu0 0.0
    %411 = vmatprep.subr.mxu0 0.0
    %412 = vmatpush1.msra.mxu0 0.0
    %413 = vmatprep.subr.mxu0 0.0
    %414 = vmatpush1.msra.mxu0 0.0
    %415 = vmatprep.subr.mxu0 0.0
    %416 = vmatpush1.msra.mxu0 0.0
    %417 = vmatprep.subr.mxu0 0.0
    %418 = vmatpush1.msra.mxu0 0.0
    %419 = vmatprep.subr.mxu0 0.0
    %420 = vmatpush1.msra.mxu0 0.0
    %421 = vmatprep.subr.mxu0 0.0
    %422 = vmatpush1.msra.mxu0 0.0
    %423 = vmatprep.subr.mxu0 0.0
    %424 = vmatpush1.msra.mxu0 0.0
    %425 = vmatprep.subr.mxu0 0.0
    %426 = vmatpush1.msra.mxu0 0.0
    %427 = vmatprep.subr.mxu0 0.0
    %428 = vmatpush1.msra.mxu0 0.0
    %429 = vmatprep.subr.mxu0 0.0
    %430 = vmatpush1.msra.mxu0 0.0
    %431 = vmatprep.subr.mxu0 0.0
    %432 = vmatpush1.msra.mxu0 0.0
    %433 = vmatprep.subr.mxu0 0.0
    %434 = vmatpush1.msra.mxu0 0.0
    %435 = vmatprep.mubr.f32.mxu0 0.0
    %436 = vmatmul.mubr.f32.gmra.mrb[0].mxu0 %v369
    %v437 = vpop.f32.mrb[0].mxu0
    %v438 = vadd.f32 0.0, %v437
    %v439 = vpop.f32.mrb[0].mxu0
    %440 = vdwg.mxu0
    %442 = vset.pattern.permute.xlu0 0
    %443 = vperm.xlu0 %442, %v359
    %v444 = vpop.permute.xlu0 %443
    %v445 = vlaneseq
    %v446 = vshrl.u32 %v445, 7
    %v447 = vsub.s32 %v291, %v446
    %v448 = vrot.slane %v444, %v447
    %v449 = vsel %vm368, %v448, 0
    %451 = vmatprep.subr.mxu0 0.0
    %452 = vmatpush1.msra.mxu0 %v66
    %453 = vmatprep.subr.mxu0 0.0
    %454 = vmatpush1.msra.mxu0 0.0
    %455 = vmatprep.subr.mxu0 0.0
    %456 = vmatpush1.msra.mxu0 0.0
    %457 = vmatprep.subr.mxu0 0.0
    %458 = vmatpush1.msra.mxu0 0.0
    %459 = vmatprep.subr.mxu0 0.0
    %460 = vmatpush1.msra.mxu0 0.0
    %461 = vmatprep.subr.mxu0 0.0
    %462 = vmatpush1.msra.mxu0 0.0
    %463 = vmatprep.subr.mxu0 0.0
    %464 = vmatpush1.msra.mxu0 0.0
    %465 = vmatprep.subr.mxu0 0.0
    %466 = vmatpush1.msra.mxu0 0.0
    %467 = vmatprep.subr.mxu0 0.0
    %468 = vmatpush1.msra.mxu0 0.0
    %469 = vmatprep.subr.mxu0 0.0
    %470 = vmatpush1.msra.mxu0 0.0
    %471 = vmatprep.subr.mxu0 0.0
    %472 = vmatpush1.msra.mxu0 0.0
    %473 = vmatprep.subr.mxu0 0.0
    %474 = vmatpush1.msra.mxu0 0.0
    %475 = vmatprep.subr.mxu0 0.0
    %476 = vmatpush1.msra.mxu0 0.0
    %477 = vmatprep.subr.mxu0 0.0
    %478 = vmatpush1.msra.mxu0 0.0
    %479 = vmatprep.subr.mxu0 0.0
    %480 = vmatpush1.msra.mxu0 0.0
    %481 = vmatprep.subr.mxu0 0.0
    %482 = vmatpush1.msra.mxu0 0.0
    %483 = vmatprep.subr.mxu0 0.0
    %484 = vmatpush1.msra.mxu0 0.0
    %485 = vmatprep.subr.mxu0 0.0
    %486 = vmatpush1.msra.mxu0 0.0
    %487 = vmatprep.subr.mxu0 0.0
    %488 = vmatpush1.msra.mxu0 0.0
    %489 = vmatprep.subr.mxu0 0.0
    %490 = vmatpush1.msra.mxu0 0.0
    %491 = vmatprep.subr.mxu0 0.0
    %492 = vmatpush1.msra.mxu0 0.0
    %493 = vmatprep.subr.mxu0 0.0
    %494 = vmatpush1.msra.mxu0 0.0
    %495 = vmatprep.subr.mxu0 0.0
    %496 = vmatpush1.msra.mxu0 0.0
    %497 = vmatprep.subr.mxu0 0.0
    %498 = vmatpush1.msra.mxu0 0.0
    %499 = vmatprep.subr.mxu0 0.0
    %500 = vmatpush1.msra.mxu0 0.0
    %501 = vmatprep.subr.mxu0 0.0
    %502 = vmatpush1.msra.mxu0 0.0
    %503 = vmatprep.subr.mxu0 0.0
    %504 = vmatpush1.msra.mxu0 0.0
    %505 = vmatprep.subr.mxu0 0.0
    %506 = vmatpush1.msra.mxu0 0.0
    %507 = vmatprep.subr.mxu0 0.0
    %508 = vmatpush1.msra.mxu0 0.0
    %509 = vmatprep.subr.mxu0 0.0
    %510 = vmatpush1.msra.mxu0 0.0
    %511 = vmatprep.subr.mxu0 0.0
    %512 = vmatpush1.msra.mxu0 0.0
    %513 = vmatprep.subr.mxu0 0.0
    %514 = vmatpush1.msra.mxu0 0.0
    %515 = vmatprep.mubr.f32.mxu0 0.0
    %516 = vmatmul.mubr.f32.gmra.mrb[0].mxu0 %v449
    %v517 = vpop.f32.mrb[0].mxu0
    %v518 = vadd.f32 0.0, %v517
    %v519 = vpop.f32.mrb[0].mxu0
    %520 = vdwg.mxu0
    %v523 = vrot.slane %v518, 7
    %v524 = vsel %vm300, %v523, %v438
    %v526 = vadd.s32 %v291, 4294967264
    %v527 = vlaneseq
    %v528 = vshrl.u32 %v527, 7
    %v529 = vsub.s32 %v526, %v528
    %v530 = vrot.slane %v363, %v529
    %v531 = vlaneseq
    %v532 = vshrl.u32 %v531, 7
    %v533 = vsub.s32 %v526, %v532
    %v534 = vrot.slane %v444, %v533
    %v535 = vsel %vm300, %v534, %v530
    %v537 = vsel %vm72, %v524, %v535
    %vm538 = vcmask 326656
    %v539 = vsel %vm538, %v537, 0.0
    %540 = vst [vmem:[#allocation8] sm:$0x3] %v539
    // Predicated region
    $region38: #{tpu_custom_call.1} parent=1 // pred_check
      _
    $region39: #{tpu_custom_call.1} parent=1 // pred_check_branch
      %542 = sbr.rel (0) target = $region41
    $region40: #{tpu_custom_call.1} parent=1 // pred_region
      %s544 = ssub.s32 32, 32
      %545 = vsyncadd [#allocation4], %s544
      %s547 = sshll.u32 [#allocation8], 4
      %s548 = int_to_ptr.vmem [resolvable:$true] %s547
      %550 = dma.vmem_to_hbm [thread:$0]  %s548, 32, %s6, [#allocation4]
    $region41: #{tpu_custom_call.1} parent=1 // pred_fallthru
      _
    // Predicated region
    $region42: #{tpu_custom_call.1} parent=1 // pred_check
      _
    $region43: #{tpu_custom_call.1} parent=1 // pred_check_branch
      %552 = sbr.rel (0) target = $region45
    $region44: #{tpu_custom_call.1} parent=1 // pred_region
      %553 = dma.done [#allocation4], 32
    $region45: #{tpu_custom_call.1} parent=1 // pred_fallthru
      _
    %554 = vsyncpa [#allocation3], 1
    %555 = vsyncpa [#allocation6], 1
    %556 = vsyncpa [#allocation4], 1

</llo_original>
